<compile_context>
chip_gen: v7x
topology: tpu7x:2x2x1
jax: 0.10.0
libtpu: 0.0.40
codegen_flags: <defaults>
</compile_context>

<pallas_src>
import numpy as np

import jax
import jax.numpy as jnp
from jax.experimental import pallas as pl
from jax.experimental.pallas import tpu as pltpu

_LANES = 128
_MAX_TILE_R = 512  # 512x128 f32 block = 256 KiB/buffer -> safe on v5e/v6e/v7x


def _fmix32(x):
    """murmur3-style 32-bit avalanche finalizer (uint32 in, uint32 out)."""
    x = x ^ (x >> jnp.uint32(16))
    x = x * jnp.uint32(0x7FEB352D)
    x = x ^ (x >> jnp.uint32(15))
    x = x * jnp.uint32(0x846CA68B)
    x = x ^ (x >> jnp.uint32(16))
    return x


def _uniform_sampler_kernel(seed_ref, low_ref, high_ref, o_ref):
    tile_r, lanes = o_ref.shape
    pid = pl.program_id(0)

    # Global flat element index of each slot in this (tile_r, lanes) block.
    row = jax.lax.broadcasted_iota(jnp.int32, (tile_r, lanes), 0)
    col = jax.lax.broadcasted_iota(jnp.int32, (tile_r, lanes), 1)
    idx = (pid * tile_r + row) * lanes + col

    # Counter-based PRNG keyed by the seed (two mixing rounds so different
    # seeds do not produce index-shifted copies of the same stream).
    seed_u = seed_ref[0].astype(jnp.uint32)
    x = idx.astype(jnp.uint32) + seed_u
    x = _fmix32(x)
    x = x ^ seed_u
    x = _fmix32(x)

    # 24-bit mantissa trick -> u in [0, 1); fold 2^-24 and (high - low) into a
    # single precomputed scalar so the float tail is one fma per element.
    low = low_ref[0]
    scale = (high_ref[0] - low) * jnp.float32(1.0 / (1 << 24))
    u24 = (x >> jnp.uint32(8)).astype(jnp.int32).astype(jnp.float32)
    o_ref[...] = (u24 * scale + low).astype(o_ref.dtype)


def uniform_sampler(low, high, sample_shape, seed: int = 0, dtype=jnp.float32):
    """Pallas equivalent of UniformSampler.forward(sample_shape)."""
    sample_shape = tuple(int(s) for s in sample_shape)
    total = int(np.prod(sample_shape)) if len(sample_shape) > 0 else 1

    out_dtype = jnp.dtype(dtype)
    itemsize = out_dtype.itemsize
    row_mult = 8 if itemsize >= 4 else 16  # (8,128) f32 / (16,128) bf16 tiles

    # Rows of 128 lanes, rounded up to a whole sublane tile.
    rows = max(row_mult, -(-total // _LANES))
    rows = -(-rows // row_mult) * row_mult

    if rows <= _MAX_TILE_R:
        tile_r = rows
        num_blocks = 1
    else:
        tile_r = _MAX_TILE_R
        rows = -(-rows // tile_r) * tile_r
        num_blocks = rows // tile_r
    padded = rows * _LANES

    seed_arr = jnp.asarray([seed], dtype=jnp.int32)
    low_arr = jnp.asarray(low, dtype=jnp.float32).reshape((1,))
    high_arr = jnp.asarray(high, dtype=jnp.float32).reshape((1,))

    out2d = pl.pallas_call(
        _uniform_sampler_kernel,
        out_shape=jax.ShapeDtypeStruct((rows, _LANES), out_dtype),
        grid=(num_blocks,),
        in_specs=[
            pl.BlockSpec(memory_space=pltpu.SMEM),  # seed
            pl.BlockSpec(memory_space=pltpu.SMEM),  # low
            pl.BlockSpec(memory_space=pltpu.SMEM),  # high
        ],
        out_specs=pl.BlockSpec((tile_r, _LANES), lambda i: (i, 0)),
        compiler_params=pltpu.CompilerParams(
            dimension_semantics=("parallel",)),
        cost_estimate=pl.CostEstimate(
            flops=2 * padded, transcendentals=0,
            bytes_accessed=padded * itemsize),
    )(seed_arr, low_arr, high_arr)

    if padded == total:
        # Tile-aligned: reshape only, no extra HBM copy for slice/cast.
        return out2d.reshape(sample_shape)
    flat = out2d.reshape((padded,))[:total]
    return flat.reshape(sample_shape)


if __name__ == "__main__":
    # Deterministic "parameters" (scalars, as in the nn.Module __init__).
    low_val = jnp.float32(0.1)
    high_val = jnp.float32(10.0)

    # Deterministic seed derived from a JAX PRNG key.
    key = jax.random.PRNGKey(0)
    seed = int(jax.random.randint(key, (), 0, 2**31 - 1))

    # Small NCHW-style sample_shape (tile-aligned fast path: 2048 elements).
    sample_shape = (2, 4, 16, 16)
    out = uniform_sampler(low_val, high_val, sample_shape, seed=seed)
    out = jax.block_until_ready(out)

    assert out.shape == sample_shape
    assert out.dtype == jnp.float32
    assert bool(jnp.all(out >= low_val)) and bool(jnp.all(out < high_val))
    assert float(jnp.std(out)) > 0.0  # not constant

    # Ragged (non-tile-aligned) path as well.
    out2 = uniform_sampler(low_val, high_val, (3, 5, 7), seed=seed + 1)
    out2 = jax.block_until_ready(out2)
    assert out2.shape == (3, 5, 7)
    assert bool(jnp.all(out2 >= low_val)) and bool(jnp.all(out2 < high_val))

    print("KERNEL_OK")
</pallas_src>

<mosaic_0001>
module attributes {stable_mosaic.version = 11 : i64} {
  func.func @_uniform_sampler_kernel(%arg0: i32, %arg1: memref<1xi32, #tpu.memory_space<smem>>, %arg2: memref<1xf32, #tpu.memory_space<smem>>, %arg3: memref<1xf32, #tpu.memory_space<smem>>, %arg4: memref<16x128xf32, #tpu.memory_space<vmem>>) attributes {dimension_semantics = [#tpu.dimension_semantics<parallel>], iteration_bounds = array<i64: 1>, scalar_prefetch = 0 : i64, scratch_operands = 0 : i64, tpu.core_type = #tpu.core_type<tc>, window_params = [{transform_indices = @transform_0, window_bounds = array<i64: 1>}, {transform_indices = @transform_1, window_bounds = array<i64: 1>}, {transform_indices = @transform_2, window_bounds = array<i64: 1>}, {transform_indices = @transform_3, window_bounds = array<i64: 16, 128>}]} {
    %0 = tpu.iota {dimensions = array<i32: 0>} : vector<16x128xi32>
    %1 = tpu.iota {dimensions = array<i32: 1>} : vector<16x128xi32>
    %c16_i32 = arith.constant 16 : i32
    %2 = arith.muli %arg0, %c16_i32 : i32
    %3 = vector.broadcast %2 : i32 to vector<16x128xi32>
    %4 = arith.addi %3, %0 : vector<16x128xi32>
    %c128_i32 = arith.constant 128 : i32
    %5 = vector.broadcast %c128_i32 : i32 to vector<16x128xi32>
    %6 = arith.muli %4, %5 : vector<16x128xi32>
    %7 = arith.addi %6, %1 : vector<16x128xi32>
    %c0 = arith.constant 0 : index
    %8 = memref.load %arg1[%c0] : memref<1xi32, #tpu.memory_space<smem>>
    %9 = vector.broadcast %8 : i32 to vector<16x128xi32>
    %10 = arith.addi %7, %9 : vector<16x128xi32>
    %c16_i32_0 = arith.constant 16 : i32
    %11 = vector.broadcast %c16_i32_0 : i32 to vector<16x128xi32>
    %12 = arith.shrui %10, %11 : vector<16x128xi32>
    %13 = arith.xori %10, %12 : vector<16x128xi32>
    %c2146121005_i32 = arith.constant 2146121005 : i32
    %14 = vector.broadcast %c2146121005_i32 : i32 to vector<16x128xi32>
    %15 = arith.muli %13, %14 : vector<16x128xi32>
    %c15_i32 = arith.constant 15 : i32
    %16 = vector.broadcast %c15_i32 : i32 to vector<16x128xi32>
    %17 = arith.shrui %15, %16 : vector<16x128xi32>
    %18 = arith.xori %15, %17 : vector<16x128xi32>
    %c-2073254261_i32 = arith.constant -2073254261 : i32
    %19 = vector.broadcast %c-2073254261_i32 : i32 to vector<16x128xi32>
    %20 = arith.muli %18, %19 : vector<16x128xi32>
    %c16_i32_1 = arith.constant 16 : i32
    %21 = vector.broadcast %c16_i32_1 : i32 to vector<16x128xi32>
    %22 = arith.shrui %20, %21 : vector<16x128xi32>
    %23 = arith.xori %20, %22 : vector<16x128xi32>
    %24 = vector.broadcast %8 : i32 to vector<16x128xi32>
    %25 = arith.xori %23, %24 : vector<16x128xi32>
    %c16_i32_2 = arith.constant 16 : i32
    %26 = vector.broadcast %c16_i32_2 : i32 to vector<16x128xi32>
    %27 = arith.shrui %25, %26 : vector<16x128xi32>
    %28 = arith.xori %25, %27 : vector<16x128xi32>
    %c2146121005_i32_3 = arith.constant 2146121005 : i32
    %29 = vector.broadcast %c2146121005_i32_3 : i32 to vector<16x128xi32>
    %30 = arith.muli %28, %29 : vector<16x128xi32>
    %c15_i32_4 = arith.constant 15 : i32
    %31 = vector.broadcast %c15_i32_4 : i32 to vector<16x128xi32>
    %32 = arith.shrui %30, %31 : vector<16x128xi32>
    %33 = arith.xori %30, %32 : vector<16x128xi32>
    %c-2073254261_i32_5 = arith.constant -2073254261 : i32
    %34 = vector.broadcast %c-2073254261_i32_5 : i32 to vector<16x128xi32>
    %35 = arith.muli %33, %34 : vector<16x128xi32>
    %c16_i32_6 = arith.constant 16 : i32
    %36 = vector.broadcast %c16_i32_6 : i32 to vector<16x128xi32>
    %37 = arith.shrui %35, %36 : vector<16x128xi32>
    %38 = arith.xori %35, %37 : vector<16x128xi32>
    %c0_7 = arith.constant 0 : index
    %39 = memref.load %arg2[%c0_7] : memref<1xf32, #tpu.memory_space<smem>>
    %c0_8 = arith.constant 0 : index
    %40 = memref.load %arg3[%c0_8] : memref<1xf32, #tpu.memory_space<smem>>
    %41 = arith.subf %40, %39 : f32
    %cst = arith.constant 5.96046448E-8 : f32
    %42 = arith.mulf %41, %cst : f32
    %c8_i32 = arith.constant 8 : i32
    %43 = vector.broadcast %c8_i32 : i32 to vector<16x128xi32>
    %44 = arith.shrui %38, %43 : vector<16x128xi32>
    %45 = arith.sitofp %44 : vector<16x128xi32> to vector<16x128xf32>
    %46 = vector.broadcast %42 : f32 to vector<16x128xf32>
    %47 = arith.mulf %45, %46 : vector<16x128xf32>
    %48 = vector.broadcast %39 : f32 to vector<16x128xf32>
    %49 = arith.addf %47, %48 : vector<16x128xf32>
    %c0_9 = arith.constant 0 : index
    %c0_10 = arith.constant 0 : index
    %50 = vector.load %arg4[%c0_9, %c0_10] : memref<16x128xf32, #tpu.memory_space<vmem>>, vector<16x128xf32>
    tpu.vector_store %arg4[%c0_9, %c0_10], %49 {strides = array<i32>} : memref<16x128xf32, #tpu.memory_space<vmem>>, vector<16x128xf32>,
    return
  }
  func.func @transform_0(%arg0: i32) -> i32 {
    %c0_i32 = arith.constant 0 : i32
    %c0_i32_0 = arith.constant 0 : i32
    return %c0_i32 : i32
  }
  func.func @transform_1(%arg0: i32) -> i32 {
    %c0_i32 = arith.constant 0 : i32
    %c0_i32_0 = arith.constant 0 : i32
    return %c0_i32 : i32
  }
  func.func @transform_2(%arg0: i32) -> i32 {
    %c0_i32 = arith.constant 0 : i32
    %c0_i32_0 = arith.constant 0 : i32
    return %c0_i32 : i32
  }
  func.func @transform_3(%arg0: i32) -> (i32, i32) {
    %c0_i32 = arith.constant 0 : i32
    %c0_i32_0 = arith.constant 0 : i32
    return %arg0, %c0_i32 : i32, i32
  }
}

</mosaic_0001>

<llo_original>
// kernel: tpu_custom_call.1
$region0: #{tpu_custom_call.1}
  #allocation0 [shape = 'u32[]', space=smem, size = 0x4, offset = 0x4, fixed_abs, tag = 'smem constant byte address 0x4 - core index']
  #allocation1 [shape = 'u32[144,128]{1,0:T(1,128)}', space=vmem, size = 0x12000, scoped, tag = 'internal scratch']
  #allocation2 [shape = 's32[1]{0:T(128)S(6)}', space=smem, size = 0x200, scoped, tag = 'scoped memory for tpu_custom_call.1']
  #allocation3 [shape = 'f32[1]{0:T(128)S(6)}', space=smem, size = 0x200, scoped, tag = 'scoped memory for tpu_custom_call.1']
  #allocation4 [shape = 'f32[1]{0:T(128)S(6)}', space=smem, size = 0x200, scoped, tag = 'scoped memory for tpu_custom_call.1']
  %s0 = inlined_call_operand.<no memory space> [shape: s32[1], index: 0, kind: input, shape index: {}]
  %s1 = inlined_call_operand.<no memory space> [shape: f32[1], index: 1, kind: input, shape index: {}]
  %s2 = inlined_call_operand.<no memory space> [shape: f32[1], index: 2, kind: input, shape index: {}]
  %s3 = inlined_call_operand.hbm [shape: f32[16,128], index: 3, kind: output, shape index: {}]
  %s4 = sld [smem:[#allocation0]]
  $region22: #{tpu_custom_call.1} parent=0
    _
  %s6 = ssub.s32 1, %s4
  %s7 = scalar_select 0, %s6, %s4
  %8 = sst [smem:[#allocation2]] %s0
  %9 = sst [smem:[#allocation3]] %s1
  %10 = sst [smem:[#allocation4]] %s2
  $region1: #{tpu_custom_call.1} parent=0
    #allocation5 [shape = 'u8[8192]{0}', space=vmem, size = 0x2000, scoped, tag = 'output window, operand 0, single buffered']
    #allocation6 [shape = 's32[1]{0}', space=sflag, size = 0x4, scoped, tag = 'scoped memory for tpu_custom_call.1']
    %11 = vsyncpa [#allocation6], 0
    // Predicated region
    $region2: #{tpu_custom_call.1} parent=1 // pred_check
      _
    $region3: #{tpu_custom_call.1} parent=1 // pred_check_branch
      %13 = sbr.rel (0) target = $region5
    $region4: #{tpu_custom_call.1} parent=1 // pred_region
      _
    $region5: #{tpu_custom_call.1} parent=1 // pred_fallthru
      _
    // Predicated region
    $region6: #{tpu_custom_call.1} parent=1 // pred_check
      _
    $region7: #{tpu_custom_call.1} parent=1 // pred_check_branch
      %15 = sbr.rel (0) target = $region9
    $region8: #{tpu_custom_call.1} parent=1 // pred_region
      _
    $region9: #{tpu_custom_call.1} parent=1 // pred_fallthru
      _
    // Predicated region
    $region10: #{tpu_custom_call.1} parent=1 // pred_check
      _
    $region11: #{tpu_custom_call.1} parent=1 // pred_check_branch
      %17 = sbr.rel (0) target = $region13
    $region12: #{tpu_custom_call.1} parent=1 // pred_region
      _
    $region13: #{tpu_custom_call.1} parent=1 // pred_fallthru
      _
    %v18 = vlaneseq
    %v19 = vshrl.u32 %v18, 7
    %v20 = vadd.s32 %v19, 8
    %v21 = vlaneseq
    %v22 = vand.u32 %v21, 127
    %s23 = smul.u32 0, 16
    %v24 = vstv %s23
    %v25 = vadd.s32 %v24, %v19
    %v26 = vadd.s32 %v24, %v20
    %v27 = vmul.u32 %v25, 128
    %v28 = vmul.u32 %v26, 128
    %v29 = vadd.s32 %v27, %v22
    %v30 = vadd.s32 %v28, %v22
    %s31 = sld [smem:[#allocation2]]
    %v32 = vstv %s31
    %v33 = vadd.s32 %v29, %v32
    %v34 = vadd.s32 %v30, %v32
    %v35 = vshrl.u32 %v33, 16
    %v36 = vshrl.u32 %v34, 16
    %v37 = vxor.u32 %v33, %v35
    %v38 = vxor.u32 %v34, %v36
    %v39 = vmul.u32 %v37, 2146121005
    %v40 = vmul.u32 %v38, 2146121005
    %v41 = vshrl.u32 %v39, 15
    %v42 = vshrl.u32 %v40, 15
    %v43 = vxor.u32 %v39, %v41
    %v44 = vxor.u32 %v40, %v42
    %v45 = vmul.u32 %v43, 2221713035
    %v46 = vmul.u32 %v44, 2221713035
    %v47 = vshrl.u32 %v45, 16
    %v48 = vshrl.u32 %v46, 16
    %v49 = vxor.u32 %v45, %v47
    %v50 = vxor.u32 %v46, %v48
    %v51 = vxor.u32 %v49, %v32
    %v52 = vxor.u32 %v50, %v32
    %v53 = vshrl.u32 %v51, 16
    %v54 = vshrl.u32 %v52, 16
    %v55 = vxor.u32 %v51, %v53
    %v56 = vxor.u32 %v52, %v54
    %v57 = vmul.u32 %v55, 2146121005
    %v58 = vmul.u32 %v56, 2146121005
    %v59 = vshrl.u32 %v57, 15
    %v60 = vshrl.u32 %v58, 15
    %v61 = vxor.u32 %v57, %v59
    %v62 = vxor.u32 %v58, %v60
    %v63 = vmul.u32 %v61, 2221713035
    %v64 = vmul.u32 %v62, 2221713035
    %v65 = vshrl.u32 %v63, 16
    %v66 = vshrl.u32 %v64, 16
    %v67 = vxor.u32 %v63, %v65
    %v68 = vxor.u32 %v64, %v66
    %s69 = sld [smem:[#allocation3]]
    %s70 = sld [smem:[#allocation4]]
    %s71 = ssub.f32 %s70, %s69
    %s72 = smul.f32 %s71, 5.9604645e-08
    %v73 = vshrl.u32 %v67, 8
    %v74 = vshrl.u32 %v68, 8
    %v75 = vcvt.s32.f32 %v73
    %v76 = vcvt.s32.f32 %v74
    %v77 = vstv %s72
    %v78 = vmul.f32 %v75, %v77
    %v79 = vmul.f32 %v76, %v77
    %v80 = vstv %s69
    %v81 = vadd.f32 %v78, %v80
    %v82 = vadd.f32 %v79, %v80
    %83 = vst [vmem:[#allocation5] sm:$0xff] %v81
    %84 = vst [vmem:[#allocation5 + $0x8] sm:$0xff] %v82
    // Predicated region
    $region14: #{tpu_custom_call.1} parent=1 // pred_check
      _
    $region15: #{tpu_custom_call.1} parent=1 // pred_check_branch
      %86 = sbr.rel (0) target = $region17
    $region16: #{tpu_custom_call.1} parent=1 // pred_region
      %s88 = ssub.s32 256, 256
      %89 = vsyncadd [#allocation6], %s88
      %s90 = sshll.u32 [#allocation5], 4
      %s91 = int_to_ptr.vmem [resolvable:$true] %s90
      %96 = dma.vmem_to_hbm [thread:$0]  %s91, 256, %s3, [#allocation6], 128, 128, 8
    $region17: #{tpu_custom_call.1} parent=1 // pred_fallthru
      _
    // Predicated region
    $region18: #{tpu_custom_call.1} parent=1 // pred_check
      _
    $region19: #{tpu_custom_call.1} parent=1 // pred_check_branch
      %98 = sbr.rel (0) target = $region21
    $region20: #{tpu_custom_call.1} parent=1 // pred_region
      %99 = dma.done [#allocation6], 256
    $region21: #{tpu_custom_call.1} parent=1 // pred_fallthru
      _
    %100 = vsyncpa [#allocation6], 1

</llo_original>
